<compile_context>
chip_gen: v6e
topology: v6e:2x2x1
jax: 0.10.0
libtpu: 0.0.40
codegen_flags: <defaults>
</compile_context>

<pallas_src>
import functools
import math

import numpy as np

import jax
import jax.numpy as jnp
from jax.experimental import pallas as pl
from jax.experimental.pallas import tpu as pltpu


def _make_dense_kernel(x_ref, w_ref, b_ref, m_ref, out_ref, *,
                       images, cin, cout, W, ksize):
    # x_ref  : (images*cin, HW)              batch tile, channels-first, flat
    # w_ref  : (ksize*ksize, images*cout, images*cin)  per-tap block-diag weights
    # b_ref  : (images*cout, 1)              bias replicated per image
    # m_ref  : (ksize*ksize, HW)             {0,1} edge-validity mask per tap
    # out_ref: (images*(cin+cout), HW)
    HW = x_ref.shape[1]
    half = (ksize - 1) // 2

    x = x_ref[...]                    # full-sublane slab (Nb*Cin rows)
    masks = m_ref[...]                # (k2, HW), resident, no per-step recompute

    acc = None
    t = 0
    for oy in range(-half, half + 1):
        for ox in range(-half, half + 1):
            delta = oy * W + ox
            shift = (-delta) % HW
            shifted = pltpu.roll(x, shift, 1) if shift else x
            if oy or ox:
                # Zero lanes whose source pixel lies in the zero padding.
                shifted = jnp.where(masks[t:t + 1, :] != 0.0, shifted, 0.0)
            # One MXU matmul per tap for the whole batch tile (block-diagonal
            # weights); only this single shifted copy is live at a time.
            contrib = jnp.dot(w_ref[t], shifted,
                              preferred_element_type=jnp.float32)
            acc = contrib if acc is None else acc + contrib
            t += 1

    conv = jnp.maximum(acc + b_ref[...], 0.0).astype(out_ref.dtype)

    # Fused channel concat: out[n] = [x[n]; relu(conv(x)[n])], written via
    # lane-dense per-image slice stores (no interleaving temporary).
    span = cin + cout
    for n in range(images):
        out_ref[n * span:n * span + cin, :] = (
            x[n * cin:(n + 1) * cin, :].astype(out_ref.dtype))
        out_ref[n * span + cin:(n + 1) * span, :] = (
            conv[n * cout:(n + 1) * cout, :])


def make_dense(x_nchw, weight, bias, kernel_size=3, batch_tile=16):
    """Forward of MakeDense.

    x_nchw : (N, Cin, H, W)        float32
    weight : (Cout, Cin, kh, kw)   float32 (PyTorch Conv2d layout)
    bias   : (Cout,)               float32
    returns: (N, Cin + Cout, H, W) float32
    """
    N, Cin, H, W = x_nchw.shape
    Cout = weight.shape[0]
    HW = H * W
    k2 = kernel_size * kernel_size
    dtype = x_nchw.dtype

    # ---- pick the per-step batch tile ------------------------------------
    # The flat row counts (Nb*Cin and Nb*(Cin+Cout)) must be multiples of the
    # 8-sublane tile, so round Nb up to the smallest unit that guarantees it.
    def _lcm(a, b):
        return a * b // math.gcd(a, b)

    unit = _lcm(8 // math.gcd(8, Cin), 8 // math.gcd(8, Cin + Cout))
    Nb = max(1, min(batch_tile, N))
    Nb = ((Nb + unit - 1) // unit) * unit
    Np = ((N + Nb - 1) // Nb) * Nb            # batch padded to multiple of Nb

    # ---- glue: free reshapes (+ rare zero-pad of the batch) --------------
    x2d = x_nchw.reshape(N * Cin, HW)
    if Np != N:
        x2d = jnp.pad(x2d, ((0, (Np - N) * Cin), (0, 0)))

    # Per-tap weights, replicated block-diagonally over the Nb images of a
    # tile: w_bd[t, n*Cout+o, m*Cin+c] = (n==m) * weight[o, c, ty, tx].
    w_taps = jnp.transpose(weight.reshape(Cout, Cin, k2), (2, 0, 1))  # (k2,Co,Ci)
    eye = jnp.eye(Nb, dtype=weight.dtype)
    w_bd = jnp.einsum('nm,toc->tnomc', eye, w_taps).reshape(
        k2, Nb * Cout, Nb * Cin)
    b_bd = jnp.tile(bias, Nb).reshape(Nb * Cout, 1)

    # Precomputed {0,1} edge masks (one row per tap).  Host constants; the
    # constant index_map keeps them resident in VMEM across grid steps.
    half = (kernel_size - 1) // 2
    pos = np.arange(HW)
    row, col = pos // W, pos % W
    mask_rows = []
    for oy in range(-half, half + 1):
        for ox in range(-half, half + 1):
            valid = np.ones(HW, dtype=bool)
            if oy < 0:
                valid &= row >= -oy
            if oy > 0:
                valid &= row < H - oy
            if ox < 0:
                valid &= col >= -ox
            if ox > 0:
                valid &= col < W - ox
            mask_rows.append(valid)
    masks = jnp.asarray(np.stack(mask_rows).astype(np.float32))       # (k2, HW)

    rows_in = Nb * Cin
    rows_out = Nb * (Cin + Cout)
    grid = (Np // Nb,)

    # Explicit VMEM budget from the block math: double-buffered in/out blocks,
    # resident weights/bias/masks, plus the live f32 intermediates.  Never set
    # below 16 MiB (v5e default), capped at 48 MiB (safe on v7x's 64 MiB).
    itemsize = jnp.dtype(dtype).itemsize
    block_bytes = (
        2 * rows_in * HW * itemsize            # input block, double buffered
        + 2 * rows_out * HW * itemsize         # output block, double buffered
        + w_bd.size * w_bd.dtype.itemsize      # block-diag weights (resident)
        + b_bd.size * 4 + masks.size * 4
        + (rows_in + 2 * Nb * Cout) * HW * 4)  # x + shifted + acc live values
    vmem_limit = int(min(48 * 1024 * 1024,
                         max(16 * 1024 * 1024, 2 * block_bytes)))

    kernel = functools.partial(
        _make_dense_kernel, images=Nb, cin=Cin, cout=Cout, W=W,
        ksize=kernel_size)

    out2d = pl.pallas_call(
        kernel,
        out_shape=jax.ShapeDtypeStruct((Np * (Cin + Cout), HW), dtype),
        grid_spec=pltpu.PrefetchScalarGridSpec(
            num_scalar_prefetch=0,
            grid=grid,
            in_specs=[
                pl.BlockSpec((rows_in, HW), lambda i: (i, 0)),
                pl.BlockSpec((k2, Nb * Cout, Nb * Cin), lambda i: (0, 0, 0)),
                pl.BlockSpec((Nb * Cout, 1), lambda i: (0, 0)),
                pl.BlockSpec((k2, HW), lambda i: (0, 0)),
            ],
            out_specs=pl.BlockSpec((rows_out, HW), lambda i: (i, 0)),
        ),
        compiler_params=pltpu.CompilerParams(
            dimension_semantics=("parallel",),
            vmem_limit_bytes=vmem_limit),
    )(x2d, w_bd, b_bd, masks)

    out2d = out2d[:N * (Cin + Cout)]
    return out2d.reshape(N, Cin + Cout, H, W)


def _reference(x_nchw, weight, bias):
    """Pure-JAX reference mirroring the PyTorch forward."""
    conv = jax.lax.conv_general_dilated(
        x_nchw, weight,
        window_strides=(1, 1),
        padding="SAME",
        dimension_numbers=("NCHW", "OIHW", "NCHW"),
        precision=jax.lax.Precision.HIGHEST,
    ) + bias.reshape(1, -1, 1, 1)
    out = jnp.maximum(conv, 0.0)
    return jnp.concatenate([x_nchw, out], axis=1)


if __name__ == "__main__":
    Cin, growth_rate, ksize, H, W = 4, 8, 3, 16, 16

    key = jax.random.PRNGKey(0)
    kp, kx1, kx2, kx3 = jax.random.split(key, 4)

    kw, kb = jax.random.split(kp)
    fan_in = Cin * ksize * ksize
    bound = 1.0 / (fan_in ** 0.5)
    weight = jax.random.uniform(kw, (growth_rate, Cin, ksize, ksize),
                                minval=-bound, maxval=bound, dtype=jnp.float32)
    bias = jax.random.uniform(kb, (growth_rate,),
                              minval=-bound, maxval=bound, dtype=jnp.float32)

    # Primary small case (N=2), the batched grid path (N=32 -> 2 steps of 16
    # images), and the batch-padding path (N=5 -> tile of 6, one padded image).
    for kx, N in ((kx1, 2), (kx2, 32), (kx3, 5)):
        x = jax.random.normal(kx, (N, Cin, H, W), dtype=jnp.float32)
        out = jax.block_until_ready(
            make_dense(x, weight, bias, kernel_size=ksize))
        ref = _reference(x, weight, bias)
        assert out.shape == (N, Cin + growth_rate, H, W), out.shape
        err = float(jnp.max(jnp.abs(out - ref)))
        assert err < 1e-5, err

    print("KERNEL_OK")
</pallas_src>

<mosaic_0001>
module attributes {stable_mosaic.version = 11 : i64} {
  func.func @_make_dense_kernel(%arg0: i32, %arg1: memref<8x256xf32, #tpu.memory_space<vmem>>, %arg2: memref<9x16x8xf32, #tpu.memory_space<vmem>>, %arg3: memref<16x1xf32, #tpu.memory_space<vmem>>, %arg4: memref<9x256xf32, #tpu.memory_space<vmem>>, %arg5: memref<24x256xf32, #tpu.memory_space<vmem>>) attributes {dimension_semantics = [#tpu.dimension_semantics<parallel>], iteration_bounds = array<i64: 1>, scalar_prefetch = 0 : i64, scratch_operands = 0 : i64, tpu.core_type = #tpu.core_type<tc>, window_params = [{transform_indices = @transform_0, window_bounds = array<i64: 8, 256>}, {pipeline_mode = #tpu.pipeline_mode<synchronous>, transform_indices = @transform_1, window_bounds = array<i64: 9, 16, 8>}, {pipeline_mode = #tpu.pipeline_mode<synchronous>, transform_indices = @transform_2, window_bounds = array<i64: 16, 1>}, {pipeline_mode = #tpu.pipeline_mode<synchronous>, transform_indices = @transform_3, window_bounds = array<i64: 9, 256>}, {transform_indices = @transform_4, window_bounds = array<i64: 24, 256>}]} {
    %c0 = arith.constant 0 : index
    %c0_0 = arith.constant 0 : index
    %0 = vector.load %arg1[%c0, %c0_0] : memref<8x256xf32, #tpu.memory_space<vmem>>, vector<8x256xf32>
    %c0_1 = arith.constant 0 : index
    %c0_2 = arith.constant 0 : index
    %1 = vector.load %arg4[%c0_1, %c0_2] : memref<9x256xf32, #tpu.memory_space<vmem>>, vector<9x256xf32>
    %c17_i32 = arith.constant 17 : i32
    %2 = tpu.dynamic_rotate %0 by %c17_i32 dim 1 : vector<8x256xf32>, i32 -> vector<8x256xf32>
    %3 = vector.extract_strided_slice %1 {offsets = [0, 0], sizes = [1, 256], strides = [1, 1]} : vector<9x256xf32> to vector<1x256xf32>
    %cst = arith.constant 0.000000e+00 : f32
    %4 = vector.broadcast %cst : f32 to vector<1x256xf32>
    %5 = arith.cmpf one, %3, %4 : vector<1x256xf32>
    %cst_3 = arith.constant 0.000000e+00 : f32
    %6 = vector.shape_cast %5 : vector<1x256xi1> to vector<1x256xi1>
    %7 = vector.broadcast %6 : vector<1x256xi1> to vector<8x256xi1>
    %8 = vector.broadcast %cst_3 : f32 to vector<8x256xf32>
    %9 = arith.select %7, %2, %8 : vector<8x256xi1>, vector<8x256xf32>
    %c0_4 = arith.constant 0 : index
    %c0_5 = arith.constant 0 : index
    %c0_6 = arith.constant 0 : index
    %10 = vector.load %arg2[%c0_4, %c0_5, %c0_6] : memref<9x16x8xf32, #tpu.memory_space<vmem>>, vector<1x16x8xf32>
    %11 = vector.shape_cast %10 : vector<1x16x8xf32> to vector<16x8xf32>
    %cst_7 = arith.constant dense<0.000000e+00> : vector<16x256xf32>
    %12 = tpu.matmul %11, %9, %cst_7 {dimension_numbers = #tpu.dot_dimension_numbers<[1], [0], [0], [1], [0, 0, 1, 1], [], []>} : vector<16x8xf32>, vector<8x256xf32>, vector<16x256xf32> -> vector<16x256xf32>
    %c16_i32 = arith.constant 16 : i32
    %13 = tpu.dynamic_rotate %0 by %c16_i32 dim 1 : vector<8x256xf32>, i32 -> vector<8x256xf32>
    %14 = vector.extract_strided_slice %1 {offsets = [1, 0], sizes = [1, 256], strides = [1, 1]} : vector<9x256xf32> to vector<1x256xf32>
    %cst_8 = arith.constant 0.000000e+00 : f32
    %15 = vector.broadcast %cst_8 : f32 to vector<1x256xf32>
    %16 = arith.cmpf one, %14, %15 : vector<1x256xf32>
    %cst_9 = arith.constant 0.000000e+00 : f32
    %17 = vector.shape_cast %16 : vector<1x256xi1> to vector<1x256xi1>
    %18 = vector.broadcast %17 : vector<1x256xi1> to vector<8x256xi1>
    %19 = vector.broadcast %cst_9 : f32 to vector<8x256xf32>
    %20 = arith.select %18, %13, %19 : vector<8x256xi1>, vector<8x256xf32>
    %c1 = arith.constant 1 : index
    %c0_10 = arith.constant 0 : index
    %c0_11 = arith.constant 0 : index
    %21 = vector.load %arg2[%c1, %c0_10, %c0_11] : memref<9x16x8xf32, #tpu.memory_space<vmem>>, vector<1x16x8xf32>
    %22 = vector.shape_cast %21 : vector<1x16x8xf32> to vector<16x8xf32>
    %cst_12 = arith.constant dense<0.000000e+00> : vector<16x256xf32>
    %23 = tpu.matmul %22, %20, %cst_12 {dimension_numbers = #tpu.dot_dimension_numbers<[1], [0], [0], [1], [0, 0, 1, 1], [], []>} : vector<16x8xf32>, vector<8x256xf32>, vector<16x256xf32> -> vector<16x256xf32>
    %24 = arith.addf %12, %23 : vector<16x256xf32>
    %c15_i32 = arith.constant 15 : i32
    %25 = tpu.dynamic_rotate %0 by %c15_i32 dim 1 : vector<8x256xf32>, i32 -> vector<8x256xf32>
    %26 = vector.extract_strided_slice %1 {offsets = [2, 0], sizes = [1, 256], strides = [1, 1]} : vector<9x256xf32> to vector<1x256xf32>
    %cst_13 = arith.constant 0.000000e+00 : f32
    %27 = vector.broadcast %cst_13 : f32 to vector<1x256xf32>
    %28 = arith.cmpf one, %26, %27 : vector<1x256xf32>
    %cst_14 = arith.constant 0.000000e+00 : f32
    %29 = vector.shape_cast %28 : vector<1x256xi1> to vector<1x256xi1>
    %30 = vector.broadcast %29 : vector<1x256xi1> to vector<8x256xi1>
    %31 = vector.broadcast %cst_14 : f32 to vector<8x256xf32>
    %32 = arith.select %30, %25, %31 : vector<8x256xi1>, vector<8x256xf32>
    %c2 = arith.constant 2 : index
    %c0_15 = arith.constant 0 : index
    %c0_16 = arith.constant 0 : index
    %33 = vector.load %arg2[%c2, %c0_15, %c0_16] : memref<9x16x8xf32, #tpu.memory_space<vmem>>, vector<1x16x8xf32>
    %34 = vector.shape_cast %33 : vector<1x16x8xf32> to vector<16x8xf32>
    %cst_17 = arith.constant dense<0.000000e+00> : vector<16x256xf32>
    %35 = tpu.matmul %34, %32, %cst_17 {dimension_numbers = #tpu.dot_dimension_numbers<[1], [0], [0], [1], [0, 0, 1, 1], [], []>} : vector<16x8xf32>, vector<8x256xf32>, vector<16x256xf32> -> vector<16x256xf32>
    %36 = arith.addf %24, %35 : vector<16x256xf32>
    %c1_i32 = arith.constant 1 : i32
    %37 = tpu.dynamic_rotate %0 by %c1_i32 dim 1 : vector<8x256xf32>, i32 -> vector<8x256xf32>
    %38 = vector.extract_strided_slice %1 {offsets = [3, 0], sizes = [1, 256], strides = [1, 1]} : vector<9x256xf32> to vector<1x256xf32>
    %cst_18 = arith.constant 0.000000e+00 : f32
    %39 = vector.broadcast %cst_18 : f32 to vector<1x256xf32>
    %40 = arith.cmpf one, %38, %39 : vector<1x256xf32>
    %cst_19 = arith.constant 0.000000e+00 : f32
    %41 = vector.shape_cast %40 : vector<1x256xi1> to vector<1x256xi1>
    %42 = vector.broadcast %41 : vector<1x256xi1> to vector<8x256xi1>
    %43 = vector.broadcast %cst_19 : f32 to vector<8x256xf32>
    %44 = arith.select %42, %37, %43 : vector<8x256xi1>, vector<8x256xf32>
    %c3 = arith.constant 3 : index
    %c0_20 = arith.constant 0 : index
    %c0_21 = arith.constant 0 : index
    %45 = vector.load %arg2[%c3, %c0_20, %c0_21] : memref<9x16x8xf32, #tpu.memory_space<vmem>>, vector<1x16x8xf32>
    %46 = vector.shape_cast %45 : vector<1x16x8xf32> to vector<16x8xf32>
    %cst_22 = arith.constant dense<0.000000e+00> : vector<16x256xf32>
    %47 = tpu.matmul %46, %44, %cst_22 {dimension_numbers = #tpu.dot_dimension_numbers<[1], [0], [0], [1], [0, 0, 1, 1], [], []>} : vector<16x8xf32>, vector<8x256xf32>, vector<16x256xf32> -> vector<16x256xf32>
    %48 = arith.addf %36, %47 : vector<16x256xf32>
    %c4 = arith.constant 4 : index
    %c0_23 = arith.constant 0 : index
    %c0_24 = arith.constant 0 : index
    %49 = vector.load %arg2[%c4, %c0_23, %c0_24] : memref<9x16x8xf32, #tpu.memory_space<vmem>>, vector<1x16x8xf32>
    %50 = vector.shape_cast %49 : vector<1x16x8xf32> to vector<16x8xf32>
    %cst_25 = arith.constant dense<0.000000e+00> : vector<16x256xf32>
    %51 = tpu.matmul %50, %0, %cst_25 {dimension_numbers = #tpu.dot_dimension_numbers<[1], [0], [0], [1], [0, 0, 1, 1], [], []>} : vector<16x8xf32>, vector<8x256xf32>, vector<16x256xf32> -> vector<16x256xf32>
    %52 = arith.addf %48, %51 : vector<16x256xf32>
    %c255_i32 = arith.constant 255 : i32
    %53 = tpu.dynamic_rotate %0 by %c255_i32 dim 1 : vector<8x256xf32>, i32 -> vector<8x256xf32>
    %54 = vector.extract_strided_slice %1 {offsets = [5, 0], sizes = [1, 256], strides = [1, 1]} : vector<9x256xf32> to vector<1x256xf32>
    %cst_26 = arith.constant 0.000000e+00 : f32
    %55 = vector.broadcast %cst_26 : f32 to vector<1x256xf32>
    %56 = arith.cmpf one, %54, %55 : vector<1x256xf32>
    %cst_27 = arith.constant 0.000000e+00 : f32
    %57 = vector.shape_cast %56 : vector<1x256xi1> to vector<1x256xi1>
    %58 = vector.broadcast %57 : vector<1x256xi1> to vector<8x256xi1>
    %59 = vector.broadcast %cst_27 : f32 to vector<8x256xf32>
    %60 = arith.select %58, %53, %59 : vector<8x256xi1>, vector<8x256xf32>
    %c5 = arith.constant 5 : index
    %c0_28 = arith.constant 0 : index
    %c0_29 = arith.constant 0 : index
    %61 = vector.load %arg2[%c5, %c0_28, %c0_29] : memref<9x16x8xf32, #tpu.memory_space<vmem>>, vector<1x16x8xf32>
    %62 = vector.shape_cast %61 : vector<1x16x8xf32> to vector<16x8xf32>
    %cst_30 = arith.constant dense<0.000000e+00> : vector<16x256xf32>
    %63 = tpu.matmul %62, %60, %cst_30 {dimension_numbers = #tpu.dot_dimension_numbers<[1], [0], [0], [1], [0, 0, 1, 1], [], []>} : vector<16x8xf32>, vector<8x256xf32>, vector<16x256xf32> -> vector<16x256xf32>
    %64 = arith.addf %52, %63 : vector<16x256xf32>
    %c241_i32 = arith.constant 241 : i32
    %65 = tpu.dynamic_rotate %0 by %c241_i32 dim 1 : vector<8x256xf32>, i32 -> vector<8x256xf32>
    %66 = vector.extract_strided_slice %1 {offsets = [6, 0], sizes = [1, 256], strides = [1, 1]} : vector<9x256xf32> to vector<1x256xf32>
    %cst_31 = arith.constant 0.000000e+00 : f32
    %67 = vector.broadcast %cst_31 : f32 to vector<1x256xf32>
    %68 = arith.cmpf one, %66, %67 : vector<1x256xf32>
    %cst_32 = arith.constant 0.000000e+00 : f32
    %69 = vector.shape_cast %68 : vector<1x256xi1> to vector<1x256xi1>
    %70 = vector.broadcast %69 : vector<1x256xi1> to vector<8x256xi1>
    %71 = vector.broadcast %cst_32 : f32 to vector<8x256xf32>
    %72 = arith.select %70, %65, %71 : vector<8x256xi1>, vector<8x256xf32>
    %c6 = arith.constant 6 : index
    %c0_33 = arith.constant 0 : index
    %c0_34 = arith.constant 0 : index
    %73 = vector.load %arg2[%c6, %c0_33, %c0_34] : memref<9x16x8xf32, #tpu.memory_space<vmem>>, vector<1x16x8xf32>
    %74 = vector.shape_cast %73 : vector<1x16x8xf32> to vector<16x8xf32>
    %cst_35 = arith.constant dense<0.000000e+00> : vector<16x256xf32>
    %75 = tpu.matmul %74, %72, %cst_35 {dimension_numbers = #tpu.dot_dimension_numbers<[1], [0], [0], [1], [0, 0, 1, 1], [], []>} : vector<16x8xf32>, vector<8x256xf32>, vector<16x256xf32> -> vector<16x256xf32>
    %76 = arith.addf %64, %75 : vector<16x256xf32>
    %c240_i32 = arith.constant 240 : i32
    %77 = tpu.dynamic_rotate %0 by %c240_i32 dim 1 : vector<8x256xf32>, i32 -> vector<8x256xf32>
    %78 = vector.extract_strided_slice %1 {offsets = [7, 0], sizes = [1, 256], strides = [1, 1]} : vector<9x256xf32> to vector<1x256xf32>
    %cst_36 = arith.constant 0.000000e+00 : f32
    %79 = vector.broadcast %cst_36 : f32 to vector<1x256xf32>
    %80 = arith.cmpf one, %78, %79 : vector<1x256xf32>
    %cst_37 = arith.constant 0.000000e+00 : f32
    %81 = vector.shape_cast %80 : vector<1x256xi1> to vector<1x256xi1>
    %82 = vector.broadcast %81 : vector<1x256xi1> to vector<8x256xi1>
    %83 = vector.broadcast %cst_37 : f32 to vector<8x256xf32>
    %84 = arith.select %82, %77, %83 : vector<8x256xi1>, vector<8x256xf32>
    %c7 = arith.constant 7 : index
    %c0_38 = arith.constant 0 : index
    %c0_39 = arith.constant 0 : index
    %85 = vector.load %arg2[%c7, %c0_38, %c0_39] : memref<9x16x8xf32, #tpu.memory_space<vmem>>, vector<1x16x8xf32>
    %86 = vector.shape_cast %85 : vector<1x16x8xf32> to vector<16x8xf32>
    %cst_40 = arith.constant dense<0.000000e+00> : vector<16x256xf32>
    %87 = tpu.matmul %86, %84, %cst_40 {dimension_numbers = #tpu.dot_dimension_numbers<[1], [0], [0], [1], [0, 0, 1, 1], [], []>} : vector<16x8xf32>, vector<8x256xf32>, vector<16x256xf32> -> vector<16x256xf32>
    %88 = arith.addf %76, %87 : vector<16x256xf32>
    %c239_i32 = arith.constant 239 : i32
    %89 = tpu.dynamic_rotate %0 by %c239_i32 dim 1 : vector<8x256xf32>, i32 -> vector<8x256xf32>
    %90 = vector.extract_strided_slice %1 {offsets = [8, 0], sizes = [1, 256], strides = [1, 1]} : vector<9x256xf32> to vector<1x256xf32>
    %cst_41 = arith.constant 0.000000e+00 : f32
    %91 = vector.broadcast %cst_41 : f32 to vector<1x256xf32>
    %92 = arith.cmpf one, %90, %91 : vector<1x256xf32>
    %cst_42 = arith.constant 0.000000e+00 : f32
    %93 = vector.shape_cast %92 : vector<1x256xi1> to vector<1x256xi1>
    %94 = vector.broadcast %93 : vector<1x256xi1> to vector<8x256xi1>
    %95 = vector.broadcast %cst_42 : f32 to vector<8x256xf32>
    %96 = arith.select %94, %89, %95 : vector<8x256xi1>, vector<8x256xf32>
    %c8 = arith.constant 8 : index
    %c0_43 = arith.constant 0 : index
    %c0_44 = arith.constant 0 : index
    %97 = vector.load %arg2[%c8, %c0_43, %c0_44] : memref<9x16x8xf32, #tpu.memory_space<vmem>>, vector<1x16x8xf32>
    %98 = vector.shape_cast %97 : vector<1x16x8xf32> to vector<16x8xf32>
    %cst_45 = arith.constant dense<0.000000e+00> : vector<16x256xf32>
    %99 = tpu.matmul %98, %96, %cst_45 {dimension_numbers = #tpu.dot_dimension_numbers<[1], [0], [0], [1], [0, 0, 1, 1], [], []>} : vector<16x8xf32>, vector<8x256xf32>, vector<16x256xf32> -> vector<16x256xf32>
    %100 = arith.addf %88, %99 : vector<16x256xf32>
    %c0_46 = arith.constant 0 : index
    %c0_47 = arith.constant 0 : index
    %101 = vector.load %arg3[%c0_46, %c0_47] : memref<16x1xf32, #tpu.memory_space<vmem>>, vector<16x1xf32>
    %102 = vector.broadcast %101 : vector<16x1xf32> to vector<16x256xf32>
    %103 = arith.addf %100, %102 : vector<16x256xf32>
    %cst_48 = arith.constant 0.000000e+00 : f32
    %104 = vector.broadcast %cst_48 : f32 to vector<16x256xf32>
    %105 = arith.maximumf %103, %104 : vector<16x256xf32>
    %106 = vector.extract_strided_slice %0 {offsets = [0, 0], sizes = [4, 256], strides = [1, 1]} : vector<8x256xf32> to vector<4x256xf32>
    %c0_49 = arith.constant 0 : index
    %c0_50 = arith.constant 0 : index
    %107 = vector.load %arg5[%c0_49, %c0_50] : memref<24x256xf32, #tpu.memory_space<vmem>>, vector<4x256xf32>
    tpu.vector_store %arg5[%c0_49, %c0_50], %106 {strides = array<i32>} : memref<24x256xf32, #tpu.memory_space<vmem>>, vector<4x256xf32>,
    %108 = vector.extract_strided_slice %105 {offsets = [0, 0], sizes = [8, 256], strides = [1, 1]} : vector<16x256xf32> to vector<8x256xf32>
    %c4_51 = arith.constant 4 : index
    %c0_52 = arith.constant 0 : index
    %109 = vector.load %arg5[%c4_51, %c0_52] : memref<24x256xf32, #tpu.memory_space<vmem>>, vector<8x256xf32>
    tpu.vector_store %arg5[%c4_51, %c0_52], %108 {strides = array<i32>} : memref<24x256xf32, #tpu.memory_space<vmem>>, vector<8x256xf32>,
    %110 = vector.extract_strided_slice %0 {offsets = [4, 0], sizes = [4, 256], strides = [1, 1]} : vector<8x256xf32> to vector<4x256xf32>
    %c12 = arith.constant 12 : index
    %c0_53 = arith.constant 0 : index
    %111 = vector.load %arg5[%c12, %c0_53] : memref<24x256xf32, #tpu.memory_space<vmem>>, vector<4x256xf32>
    tpu.vector_store %arg5[%c12, %c0_53], %110 {strides = array<i32>} : memref<24x256xf32, #tpu.memory_space<vmem>>, vector<4x256xf32>,
    %112 = vector.extract_strided_slice %105 {offsets = [8, 0], sizes = [8, 256], strides = [1, 1]} : vector<16x256xf32> to vector<8x256xf32>
    %c16 = arith.constant 16 : index
    %c0_54 = arith.constant 0 : index
    %113 = vector.load %arg5[%c16, %c0_54] : memref<24x256xf32, #tpu.memory_space<vmem>>, vector<8x256xf32>
    tpu.vector_store %arg5[%c16, %c0_54], %112 {strides = array<i32>} : memref<24x256xf32, #tpu.memory_space<vmem>>, vector<8x256xf32>,
    return
  }
  func.func @transform_0(%arg0: i32) -> (i32, i32) {
    %c0_i32 = arith.constant 0 : i32
    %c0_i32_0 = arith.constant 0 : i32
    return %arg0, %c0_i32 : i32, i32
  }
  func.func @transform_1(%arg0: i32) -> (i32, i32, i32) {
    %c0_i32 = arith.constant 0 : i32
    %c0_i32_0 = arith.constant 0 : i32
    %c0_i32_1 = arith.constant 0 : i32
    %c0_i32_2 = arith.constant 0 : i32
    return %c0_i32, %c0_i32_0, %c0_i32_1 : i32, i32, i32
  }
  func.func @transform_2(%arg0: i32) -> (i32, i32) {
    %c0_i32 = arith.constant 0 : i32
    %c0_i32_0 = arith.constant 0 : i32
    %c0_i32_1 = arith.constant 0 : i32
    return %c0_i32, %c0_i32_0 : i32, i32
  }
  func.func @transform_3(%arg0: i32) -> (i32, i32) {
    %c0_i32 = arith.constant 0 : i32
    %c0_i32_0 = arith.constant 0 : i32
    %c0_i32_1 = arith.constant 0 : i32
    return %c0_i32, %c0_i32_0 : i32, i32
  }
  func.func @transform_4(%arg0: i32) -> (i32, i32) {
    %c0_i32 = arith.constant 0 : i32
    %c0_i32_0 = arith.constant 0 : i32
    return %arg0, %c0_i32 : i32, i32
  }
}

</mosaic_0001>

<llo_original>
// kernel: tpu_custom_call.1
$region0: #{tpu_custom_call.1}
  #allocation0 [shape = 'u32[]', space=smem, size = 0x4, offset = 0x4, fixed_abs, tag = 'smem constant byte address 0x4 - core index']
  #allocation1 [shape = 'u32[144,128]{1,0:T(1,128)}', space=vmem, size = 0x12000, scoped, tag = 'internal scratch']
  %s0 = inlined_call_operand.vmem [shape: f32[8,256], index: 0, kind: input, shape index: {}]
  %s1 = inlined_call_operand.vmem [shape: f32[9,16,8], index: 1, kind: input, shape index: {}]
  %s2 = inlined_call_operand.vmem [shape: f32[16,1], index: 2, kind: input, shape index: {}]
  %s3 = inlined_call_operand.vmem [shape: f32[9,256], index: 3, kind: input, shape index: {}]
  %s4 = inlined_call_operand.hbm [shape: f32[24,256], index: 4, kind: output, shape index: {}]
  %s5 = sld [smem:[#allocation0]]
  $region26: #{tpu_custom_call.1} parent=0
    _
  %s7 = ssub.s32 1, %s5
  %s8 = scalar_select 0, %s7, %s5
  $region1: #{tpu_custom_call.1} parent=0
    #allocation2 [shape = 'u8[24576]{0}', space=vmem, size = 0x6000, scoped, tag = 'output window, operand 0, single buffered']
    #allocation3 [shape = 's32[1]{0}', space=sflag, size = 0x4, scoped, tag = 'scoped memory for tpu_custom_call.1']
    %9 = vsyncpa [#allocation3], 0
    // Predicated region
    $region2: #{tpu_custom_call.1} parent=1 // pred_check
      _
    $region3: #{tpu_custom_call.1} parent=1 // pred_check_branch
      %11 = sbr.rel (0) target = $region5
    $region4: #{tpu_custom_call.1} parent=1 // pred_region
      _
    $region5: #{tpu_custom_call.1} parent=1 // pred_fallthru
      _
    // Predicated region
    $region6: #{tpu_custom_call.1} parent=1 // pred_check
      _
    $region7: #{tpu_custom_call.1} parent=1 // pred_check_branch
      %13 = sbr.rel (0) target = $region9
    $region8: #{tpu_custom_call.1} parent=1 // pred_region
      _
    $region9: #{tpu_custom_call.1} parent=1 // pred_fallthru
      _
    // Predicated region
    $region10: #{tpu_custom_call.1} parent=1 // pred_check
      _
    $region11: #{tpu_custom_call.1} parent=1 // pred_check_branch
      %15 = sbr.rel (0) target = $region13
    $region12: #{tpu_custom_call.1} parent=1 // pred_region
      _
    $region13: #{tpu_custom_call.1} parent=1 // pred_fallthru
      _
    // Predicated region
    $region14: #{tpu_custom_call.1} parent=1 // pred_check
      _
    $region15: #{tpu_custom_call.1} parent=1 // pred_check_branch
      %17 = sbr.rel (0) target = $region17
    $region16: #{tpu_custom_call.1} parent=1 // pred_region
      _
    $region17: #{tpu_custom_call.1} parent=1 // pred_fallthru
      _
    %v18 = vld [vmem:[%s0] sm:$0xff]
    %v19 = vld [vmem:[%s0 + $0x8] sm:$0xff]
    %v20 = vld [vmem:[%s3] sm:$0xff]
    %v21 = vld [vmem:[%s3 + $0x8] sm:$0xff]
    %v22 = vld [vmem:[%s3 + $0x10] sm:$0x1]
    %v23 = vld [vmem:[%s3 + $0x18] sm:$0x1]
    %24 = vrot.lane.b32.xlu0 %v18, 17
    %v25 = vpop.permute.xlu0 %24
    %26 = vrot.lane.b32.xlu0 %v19, 17
    %v27 = vpop.permute.xlu0 %26
    %v28 = vlaneseq
    %v29 = vand.u32 %v28, 127
    %vm30 = vcmp.lt.s32.totalorder %v29, 17
    %v31 = vsel %vm30, %v25, %v27
    %v32 = vsel %vm30, %v27, %v25
    %vm33 = vcmp.ne.f32.partialorder %v20, 0.0
    %vm34 = vcmp.ne.f32.partialorder %v21, 0.0
    %v35 = vsel %vm33, 1, 0
    %v36 = vsel %vm34, 1, 0
    %v37 = vlaneseq
    %v38 = vshrl.u32 %v37, 7
    %v39 = vsub.s32 0, %v38
    %v40 = vrot.slane %v35, %v39
    %v41 = vlaneseq
    %v42 = vshrl.u32 %v41, 7
    %v43 = vsub.s32 0, %v42
    %v44 = vrot.slane %v36, %v43
    %vm45 = vcmp.eq.s32.totalorder %v40, 1
    %vm46 = vcmp.eq.s32.totalorder %v44, 1
    %v47 = vsel %vm45, %v32, 0.0
    %v48 = vsel %vm46, %v31, 0.0
    %v49 = vld [vmem:[%s1] sm:$0xff]
    %v50 = vld [vmem:[%s1 + $0x8] sm:$0xff]
    %51 = vrot.lane.b32.xlu0 %v18, 16
    %v52 = vpop.permute.xlu0 %51
    %53 = vrot.lane.b32.xlu0 %v19, 16
    %v54 = vpop.permute.xlu0 %53
    %vm55 = vcmp.lt.s32.totalorder %v29, 16
    %v56 = vsel %vm55, %v52, %v54
    %v57 = vsel %vm55, %v54, %v52
    %v58 = vlaneseq
    %v59 = vshrl.u32 %v58, 7
    %v60 = vsub.s32 1, %v59
    %v61 = vrot.slane %v35, %v60
    %v62 = vlaneseq
    %v63 = vshrl.u32 %v62, 7
    %v64 = vsub.s32 1, %v63
    %v65 = vrot.slane %v36, %v64
    %vm66 = vcmp.eq.s32.totalorder %v61, 1
    %vm67 = vcmp.eq.s32.totalorder %v65, 1
    %v68 = vsel %vm66, %v57, 0.0
    %v69 = vsel %vm67, %v56, 0.0
    %s70 = scalar_lea.vmem %s1, 16
    %v71 = vld [vmem:[%s70] sm:$0xff]
    %v72 = vld [vmem:[%s70 + $0x8] sm:$0xff]
    %vm73 = vcmask 64512
    %v75 = vsel %vm73, %v71, 0
    %v78 = vsel %vm73, %v72, 0
    %80 = vmatprep.subr.mxu0 0.0
    %81 = vmatpush1.msra.mxu0 0.0
    %82 = vmatprep.subr.mxu0 0.0
    %83 = vmatpush1.msra.mxu0 0.0
    %84 = vmatprep.subr.mxu0 0.0
    %85 = vmatpush1.msra.mxu0 0.0
    %86 = vmatprep.subr.mxu0 0.0
    %87 = vmatpush1.msra.mxu0 0.0
    %88 = vmatprep.subr.mxu0 0.0
    %89 = vmatpush1.msra.mxu0 0.0
    %90 = vmatprep.subr.mxu0 0.0
    %91 = vmatpush1.msra.mxu0 0.0
    %92 = vmatprep.subr.mxu0 0.0
    %93 = vmatpush1.msra.mxu0 0.0
    %94 = vmatprep.subr.mxu0 0.0
    %95 = vmatpush1.msra.mxu0 0.0
    %96 = vmatprep.subr.mxu0 0.0
    %97 = vmatpush1.msra.mxu0 0.0
    %98 = vmatprep.subr.mxu0 0.0
    %99 = vmatpush1.msra.mxu0 0.0
    %100 = vmatprep.subr.mxu0 0.0
    %101 = vmatpush1.msra.mxu0 0.0
    %102 = vmatprep.subr.mxu0 0.0
    %103 = vmatpush1.msra.mxu0 0.0
    %104 = vmatprep.subr.mxu0 0.0
    %105 = vmatpush1.msra.mxu0 0.0
    %106 = vmatprep.subr.mxu0 0.0
    %107 = vmatpush1.msra.mxu0 0.0
    %108 = vmatprep.subr.mxu0 0.0
    %109 = vmatpush1.msra.mxu0 0.0
    %110 = vmatprep.subr.mxu0 %v69
    %111 = vmatpush1.msra.mxu0 %v68
    %112 = vmatprep.subr.mxu0 0.0
    %113 = vmatpush2.msra.mxu0 0.0
    %114 = vmatprep.subr.mxu0 0.0
    %115 = vmatpush2.msra.mxu0 0.0
    %116 = vmatprep.subr.mxu0 0.0
    %117 = vmatpush2.msra.mxu0 0.0
    %118 = vmatprep.subr.mxu0 0.0
    %119 = vmatpush2.msra.mxu0 0.0
    %120 = vmatprep.subr.mxu0 0.0
    %121 = vmatpush2.msra.mxu0 0.0
    %122 = vmatprep.subr.mxu0 0.0
    %123 = vmatpush2.msra.mxu0 0.0
    %124 = vmatprep.subr.mxu0 0.0
    %125 = vmatpush2.msra.mxu0 0.0
    %126 = vmatprep.subr.mxu0 0.0
    %127 = vmatpush2.msra.mxu0 0.0
    %128 = vmatprep.subr.mxu0 0.0
    %129 = vmatpush2.msra.mxu0 0.0
    %130 = vmatprep.subr.mxu0 0.0
    %131 = vmatpush2.msra.mxu0 0.0
    %132 = vmatprep.subr.mxu0 0.0
    %133 = vmatpush2.msra.mxu0 0.0
    %134 = vmatprep.subr.mxu0 0.0
    %135 = vmatpush2.msra.mxu0 0.0
    %136 = vmatprep.subr.mxu0 0.0
    %137 = vmatpush2.msra.mxu0 0.0
    %138 = vmatprep.subr.mxu0 0.0
    %139 = vmatpush2.msra.mxu0 0.0
    %140 = vmatprep.subr.mxu0 0.0
    %141 = vmatpush2.msra.mxu0 0.0
    %142 = vmatprep.subr.mxu0 0.0
    %143 = vmatpush2.msra.mxu0 0.0
    %144 = vmatprep.mubr.f32.mxu0 0.0
    %145 = vmatmul.mubr.f32.gmra.mxu0 %v75
    %v146 = vpop.f32.mrf.mxu0
    %v147 = vadd.f32 0.0, %v146
    %v148 = vpop.f32.mrf.mxu0
    %v149 = vadd.f32 0.0, %v148
    %150 = vmatprep.mubr.f32.mxu0 0.0
    %151 = vmatmul.mubr.f32.gmra.mxu0 %v78
    %v152 = vpop.f32.mrf.mxu0
    %v153 = vadd.f32 0.0, %v152
    %v154 = vpop.f32.mrf.mxu0
    %v155 = vadd.f32 0.0, %v154
    %156 = vdwg.mxu0
    %v158 = vsel %vm73, %v49, 0
    %v161 = vsel %vm73, %v50, 0
    %163 = vmatprep.subr.mxu0 0.0
    %164 = vmatpush1.msra.mxu0 0.0
    %165 = vmatprep.subr.mxu0 0.0
    %166 = vmatpush1.msra.mxu0 0.0
    %167 = vmatprep.subr.mxu0 0.0
    %168 = vmatpush1.msra.mxu0 0.0
    %169 = vmatprep.subr.mxu0 0.0
    %170 = vmatpush1.msra.mxu0 0.0
    %171 = vmatprep.subr.mxu0 0.0
    %172 = vmatpush1.msra.mxu0 0.0
    %173 = vmatprep.subr.mxu0 0.0
    %174 = vmatpush1.msra.mxu0 0.0
    %175 = vmatprep.subr.mxu0 0.0
    %176 = vmatpush1.msra.mxu0 0.0
    %177 = vmatprep.subr.mxu0 0.0
    %178 = vmatpush1.msra.mxu0 0.0
    %179 = vmatprep.subr.mxu0 0.0
    %180 = vmatpush1.msra.mxu0 0.0
    %181 = vmatprep.subr.mxu0 0.0
    %182 = vmatpush1.msra.mxu0 0.0
    %183 = vmatprep.subr.mxu0 0.0
    %184 = vmatpush1.msra.mxu0 0.0
    %185 = vmatprep.subr.mxu0 0.0
    %186 = vmatpush1.msra.mxu0 0.0
    %187 = vmatprep.subr.mxu0 0.0
    %188 = vmatpush1.msra.mxu0 0.0
    %189 = vmatprep.subr.mxu0 0.0
    %190 = vmatpush1.msra.mxu0 0.0
    %191 = vmatprep.subr.mxu0 0.0
    %192 = vmatpush1.msra.mxu0 0.0
    %193 = vmatprep.subr.mxu0 %v48
    %194 = vmatpush1.msra.mxu0 %v47
    %195 = vmatprep.subr.mxu0 0.0
    %196 = vmatpush2.msra.mxu0 0.0
    %197 = vmatprep.subr.mxu0 0.0
    %198 = vmatpush2.msra.mxu0 0.0
    %199 = vmatprep.subr.mxu0 0.0
    %200 = vmatpush2.msra.mxu0 0.0
    %201 = vmatprep.subr.mxu0 0.0
    %202 = vmatpush2.msra.mxu0 0.0
    %203 = vmatprep.subr.mxu0 0.0
    %204 = vmatpush2.msra.mxu0 0.0
    %205 = vmatprep.subr.mxu0 0.0
    %206 = vmatpush2.msra.mxu0 0.0
    %207 = vmatprep.subr.mxu0 0.0
    %208 = vmatpush2.msra.mxu0 0.0
    %209 = vmatprep.subr.mxu0 0.0
    %210 = vmatpush2.msra.mxu0 0.0
    %211 = vmatprep.subr.mxu0 0.0
    %212 = vmatpush2.msra.mxu0 0.0
    %213 = vmatprep.subr.mxu0 0.0
    %214 = vmatpush2.msra.mxu0 0.0
    %215 = vmatprep.subr.mxu0 0.0
    %216 = vmatpush2.msra.mxu0 0.0
    %217 = vmatprep.subr.mxu0 0.0
    %218 = vmatpush2.msra.mxu0 0.0
    %219 = vmatprep.subr.mxu0 0.0
    %220 = vmatpush2.msra.mxu0 0.0
    %221 = vmatprep.subr.mxu0 0.0
    %222 = vmatpush2.msra.mxu0 0.0
    %223 = vmatprep.subr.mxu0 0.0
    %224 = vmatpush2.msra.mxu0 0.0
    %225 = vmatprep.subr.mxu0 0.0
    %226 = vmatpush2.msra.mxu0 0.0
    %227 = vmatprep.mubr.f32.mxu0 0.0
    %228 = vmatmul.mubr.f32.gmra.mxu0 %v158
    %v229 = vpop.f32.mrf.mxu0
    %v230 = vadd.f32 %v147, %v229
    %v231 = vpop.f32.mrf.mxu0
    %v232 = vadd.f32 %v149, %v231
    %233 = vmatprep.mubr.f32.mxu0 0.0
    %234 = vmatmul.mubr.f32.gmra.mxu0 %v161
    %v235 = vpop.f32.mrf.mxu0
    %v236 = vadd.f32 %v153, %v235
    %v237 = vpop.f32.mrf.mxu0
    %v238 = vadd.f32 %v155, %v237
    %239 = vdwg.mxu0
    %240 = vrot.lane.b32.xlu0 %v18, 15
    %v241 = vpop.permute.xlu0 %240
    %242 = vrot.lane.b32.xlu0 %v19, 15
    %v243 = vpop.permute.xlu0 %242
    %vm244 = vcmp.lt.s32.totalorder %v29, 15
    %v245 = vsel %vm244, %v241, %v243
    %v246 = vsel %vm244, %v243, %v241
    %v247 = vlaneseq
    %v248 = vshrl.u32 %v247, 7
    %v249 = vsub.s32 2, %v248
    %v250 = vrot.slane %v35, %v249
    %v251 = vlaneseq
    %v252 = vshrl.u32 %v251, 7
    %v253 = vsub.s32 2, %v252
    %v254 = vrot.slane %v36, %v253
    %vm255 = vcmp.eq.s32.totalorder %v250, 1
    %vm256 = vcmp.eq.s32.totalorder %v254, 1
    %v257 = vsel %vm255, %v246, 0.0
    %v258 = vsel %vm256, %v245, 0.0
    %s259 = scalar_lea.vmem %s1, 32
    %v260 = vld [vmem:[%s259] sm:$0xff]
    %v261 = vld [vmem:[%s259 + $0x8] sm:$0xff]
    %v263 = vsel %vm73, %v260, 0
    %v266 = vsel %vm73, %v261, 0
    %268 = vmatprep.subr.mxu0 0.0
    %269 = vmatpush1.msra.mxu0 0.0
    %270 = vmatprep.subr.mxu0 0.0
    %271 = vmatpush1.msra.mxu0 0.0
    %272 = vmatprep.subr.mxu0 0.0
    %273 = vmatpush1.msra.mxu0 0.0
    %274 = vmatprep.subr.mxu0 0.0
    %275 = vmatpush1.msra.mxu0 0.0
    %276 = vmatprep.subr.mxu0 0.0
    %277 = vmatpush1.msra.mxu0 0.0
    %278 = vmatprep.subr.mxu0 0.0
    %279 = vmatpush1.msra.mxu0 0.0
    %280 = vmatprep.subr.mxu0 0.0
    %281 = vmatpush1.msra.mxu0 0.0
    %282 = vmatprep.subr.mxu0 0.0
    %283 = vmatpush1.msra.mxu0 0.0
    %284 = vmatprep.subr.mxu0 0.0
    %285 = vmatpush1.msra.mxu0 0.0
    %286 = vmatprep.subr.mxu0 0.0
    %287 = vmatpush1.msra.mxu0 0.0
    %288 = vmatprep.subr.mxu0 0.0
    %289 = vmatpush1.msra.mxu0 0.0
    %290 = vmatprep.subr.mxu0 0.0
    %291 = vmatpush1.msra.mxu0 0.0
    %292 = vmatprep.subr.mxu0 0.0
    %293 = vmatpush1.msra.mxu0 0.0
    %294 = vmatprep.subr.mxu0 0.0
    %295 = vmatpush1.msra.mxu0 0.0
    %296 = vmatprep.subr.mxu0 0.0
    %297 = vmatpush1.msra.mxu0 0.0
    %298 = vmatprep.subr.mxu0 %v258
    %299 = vmatpush1.msra.mxu0 %v257
    %300 = vmatprep.subr.mxu0 0.0
    %301 = vmatpush2.msra.mxu0 0.0
    %302 = vmatprep.subr.mxu0 0.0
    %303 = vmatpush2.msra.mxu0 0.0
    %304 = vmatprep.subr.mxu0 0.0
    %305 = vmatpush2.msra.mxu0 0.0
    %306 = vmatprep.subr.mxu0 0.0
    %307 = vmatpush2.msra.mxu0 0.0
    %308 = vmatprep.subr.mxu0 0.0
    %309 = vmatpush2.msra.mxu0 0.0
    %310 = vmatprep.subr.mxu0 0.0
    %311 = vmatpush2.msra.mxu0 0.0
    %312 = vmatprep.subr.mxu0 0.0
    %313 = vmatpush2.msra.mxu0 0.0
    %314 = vmatprep.subr.mxu0 0.0
    %315 = vmatpush2.msra.mxu0 0.0
    %316 = vmatprep.subr.mxu0 0.0
    %317 = vmatpush2.msra.mxu0 0.0
    %318 = vmatprep.subr.mxu0 0.0
    %319 = vmatpush2.msra.mxu0 0.0
    %320 = vmatprep.subr.mxu0 0.0
    %321 = vmatpush2.msra.mxu0 0.0
    %322 = vmatprep.subr.mxu0 0.0
    %323 = vmatpush2.msra.mxu0 0.0
    %324 = vmatprep.subr.mxu0 0.0
    %325 = vmatpush2.msra.mxu0 0.0
    %326 = vmatprep.subr.mxu0 0.0
    %327 = vmatpush2.msra.mxu0 0.0
    %328 = vmatprep.subr.mxu0 0.0
    %329 = vmatpush2.msra.mxu0 0.0
    %330 = vmatprep.subr.mxu0 0.0
    %331 = vmatpush2.msra.mxu0 0.0
    %332 = vmatprep.mubr.f32.mxu0 0.0
    %333 = vmatmul.mubr.f32.gmra.mxu0 %v263
    %v334 = vpop.f32.mrf.mxu0
    %v335 = vadd.f32 0.0, %v334
    %v336 = vpop.f32.mrf.mxu0
    %v337 = vadd.f32 0.0, %v336
    %338 = vmatprep.mubr.f32.mxu0 0.0
    %339 = vmatmul.mubr.f32.gmra.mxu0 %v266
    %v340 = vpop.f32.mrf.mxu0
    %v341 = vadd.f32 0.0, %v340
    %v342 = vpop.f32.mrf.mxu0
    %v343 = vadd.f32 0.0, %v342
    %344 = vdwg.mxu0
    %v345 = vadd.f32 %v230, %v335
    %v346 = vadd.f32 %v232, %v337
    %v347 = vadd.f32 %v236, %v341
    %v348 = vadd.f32 %v238, %v343
    %349 = vrot.lane.b32.xlu0 %v18, 1
    %v350 = vpop.permute.xlu0 %349
    %351 = vrot.lane.b32.xlu0 %v19, 1
    %v352 = vpop.permute.xlu0 %351
    %vm353 = vcmp.lt.s32.totalorder %v29, 1
    %v354 = vsel %vm353, %v350, %v352
    %v355 = vsel %vm353, %v352, %v350
    %v356 = vlaneseq
    %v357 = vshrl.u32 %v356, 7
    %v358 = vsub.s32 3, %v357
    %v359 = vrot.slane %v35, %v358
    %v360 = vlaneseq
    %v361 = vshrl.u32 %v360, 7
    %v362 = vsub.s32 3, %v361
    %v363 = vrot.slane %v36, %v362
    %vm364 = vcmp.eq.s32.totalorder %v359, 1
    %vm365 = vcmp.eq.s32.totalorder %v363, 1
    %v366 = vsel %vm364, %v355, 0.0
    %v367 = vsel %vm365, %v354, 0.0
    %s368 = scalar_lea.vmem %s1, 48
    %v369 = vld [vmem:[%s368] sm:$0xff]
    %v370 = vld [vmem:[%s368 + $0x8] sm:$0xff]
    %v372 = vsel %vm73, %v369, 0
    %v375 = vsel %vm73, %v370, 0
    %377 = vmatprep.subr.mxu0 0.0
    %378 = vmatpush1.msra.mxu0 0.0
    %379 = vmatprep.subr.mxu0 0.0
    %380 = vmatpush1.msra.mxu0 0.0
    %381 = vmatprep.subr.mxu0 0.0
    %382 = vmatpush1.msra.mxu0 0.0
    %383 = vmatprep.subr.mxu0 0.0
    %384 = vmatpush1.msra.mxu0 0.0
    %385 = vmatprep.subr.mxu0 0.0
    %386 = vmatpush1.msra.mxu0 0.0
    %387 = vmatprep.subr.mxu0 0.0
    %388 = vmatpush1.msra.mxu0 0.0
    %389 = vmatprep.subr.mxu0 0.0
    %390 = vmatpush1.msra.mxu0 0.0
    %391 = vmatprep.subr.mxu0 0.0
    %392 = vmatpush1.msra.mxu0 0.0
    %393 = vmatprep.subr.mxu0 0.0
    %394 = vmatpush1.msra.mxu0 0.0
    %395 = vmatprep.subr.mxu0 0.0
    %396 = vmatpush1.msra.mxu0 0.0
    %397 = vmatprep.subr.mxu0 0.0
    %398 = vmatpush1.msra.mxu0 0.0
    %399 = vmatprep.subr.mxu0 0.0
    %400 = vmatpush1.msra.mxu0 0.0
    %401 = vmatprep.subr.mxu0 0.0
    %402 = vmatpush1.msra.mxu0 0.0
    %403 = vmatprep.subr.mxu0 0.0
    %404 = vmatpush1.msra.mxu0 0.0
    %405 = vmatprep.subr.mxu0 0.0
    %406 = vmatpush1.msra.mxu0 0.0
    %407 = vmatprep.subr.mxu0 %v367
    %408 = vmatpush1.msra.mxu0 %v366
    %409 = vmatprep.subr.mxu0 0.0
    %410 = vmatpush2.msra.mxu0 0.0
    %411 = vmatprep.subr.mxu0 0.0
    %412 = vmatpush2.msra.mxu0 0.0
    %413 = vmatprep.subr.mxu0 0.0
    %414 = vmatpush2.msra.mxu0 0.0
    %415 = vmatprep.subr.mxu0 0.0
    %416 = vmatpush2.msra.mxu0 0.0
    %417 = vmatprep.subr.mxu0 0.0
    %418 = vmatpush2.msra.mxu0 0.0
    %419 = vmatprep.subr.mxu0 0.0
    %420 = vmatpush2.msra.mxu0 0.0
    %421 = vmatprep.subr.mxu0 0.0
    %422 = vmatpush2.msra.mxu0 0.0
    %423 = vmatprep.subr.mxu0 0.0
    %424 = vmatpush2.msra.mxu0 0.0
    %425 = vmatprep.subr.mxu0 0.0
    %426 = vmatpush2.msra.mxu0 0.0
    %427 = vmatprep.subr.mxu0 0.0
    %428 = vmatpush2.msra.mxu0 0.0
    %429 = vmatprep.subr.mxu0 0.0
    %430 = vmatpush2.msra.mxu0 0.0
    %431 = vmatprep.subr.mxu0 0.0
    %432 = vmatpush2.msra.mxu0 0.0
    %433 = vmatprep.subr.mxu0 0.0
    %434 = vmatpush2.msra.mxu0 0.0
    %435 = vmatprep.subr.mxu0 0.0
    %436 = vmatpush2.msra.mxu0 0.0
    %437 = vmatprep.subr.mxu0 0.0
    %438 = vmatpush2.msra.mxu0 0.0
    %439 = vmatprep.subr.mxu0 0.0
    %440 = vmatpush2.msra.mxu0 0.0
    %441 = vmatprep.mubr.f32.mxu0 0.0
    %442 = vmatmul.mubr.f32.gmra.mxu0 %v372
    %v443 = vpop.f32.mrf.mxu0
    %v444 = vadd.f32 0.0, %v443
    %v445 = vpop.f32.mrf.mxu0
    %v446 = vadd.f32 0.0, %v445
    %447 = vmatprep.mubr.f32.mxu0 0.0
    %448 = vmatmul.mubr.f32.gmra.mxu0 %v375
    %v449 = vpop.f32.mrf.mxu0
    %v450 = vadd.f32 0.0, %v449
    %v451 = vpop.f32.mrf.mxu0
    %v452 = vadd.f32 0.0, %v451
    %453 = vdwg.mxu0
    %v454 = vadd.f32 %v345, %v444
    %v455 = vadd.f32 %v346, %v446
    %v456 = vadd.f32 %v347, %v450
    %v457 = vadd.f32 %v348, %v452
    %s458 = scalar_lea.vmem %s1, 64
    %v459 = vld [vmem:[%s458] sm:$0xff]
    %v460 = vld [vmem:[%s458 + $0x8] sm:$0xff]
    %v462 = vsel %vm73, %v459, 0
    %v465 = vsel %vm73, %v460, 0
    %467 = vmatprep.subr.mxu0 0.0
    %468 = vmatpush1.msra.mxu0 0.0
    %469 = vmatprep.subr.mxu0 0.0
    %470 = vmatpush1.msra.mxu0 0.0
    %471 = vmatprep.subr.mxu0 0.0
    %472 = vmatpush1.msra.mxu0 0.0
    %473 = vmatprep.subr.mxu0 0.0
    %474 = vmatpush1.msra.mxu0 0.0
    %475 = vmatprep.subr.mxu0 0.0
    %476 = vmatpush1.msra.mxu0 0.0
    %477 = vmatprep.subr.mxu0 0.0
    %478 = vmatpush1.msra.mxu0 0.0
    %479 = vmatprep.subr.mxu0 0.0
    %480 = vmatpush1.msra.mxu0 0.0
    %481 = vmatprep.subr.mxu0 0.0
    %482 = vmatpush1.msra.mxu0 0.0
    %483 = vmatprep.subr.mxu0 0.0
    %484 = vmatpush1.msra.mxu0 0.0
    %485 = vmatprep.subr.mxu0 0.0
    %486 = vmatpush1.msra.mxu0 0.0
    %487 = vmatprep.subr.mxu0 0.0
    %488 = vmatpush1.msra.mxu0 0.0
    %489 = vmatprep.subr.mxu0 0.0
    %490 = vmatpush1.msra.mxu0 0.0
    %491 = vmatprep.subr.mxu0 0.0
    %492 = vmatpush1.msra.mxu0 0.0
    %493 = vmatprep.subr.mxu0 0.0
    %494 = vmatpush1.msra.mxu0 0.0
    %495 = vmatprep.subr.mxu0 0.0
    %496 = vmatpush1.msra.mxu0 0.0
    %497 = vmatprep.subr.mxu0 %v19
    %498 = vmatpush1.msra.mxu0 %v18
    %499 = vmatprep.subr.mxu0 0.0
    %500 = vmatpush2.msra.mxu0 0.0
    %501 = vmatprep.subr.mxu0 0.0
    %502 = vmatpush2.msra.mxu0 0.0
    %503 = vmatprep.subr.mxu0 0.0
    %504 = vmatpush2.msra.mxu0 0.0
    %505 = vmatprep.subr.mxu0 0.0
    %506 = vmatpush2.msra.mxu0 0.0
    %507 = vmatprep.subr.mxu0 0.0
    %508 = vmatpush2.msra.mxu0 0.0
    %509 = vmatprep.subr.mxu0 0.0
    %510 = vmatpush2.msra.mxu0 0.0
    %511 = vmatprep.subr.mxu0 0.0
    %512 = vmatpush2.msra.mxu0 0.0
    %513 = vmatprep.subr.mxu0 0.0
    %514 = vmatpush2.msra.mxu0 0.0
    %515 = vmatprep.subr.mxu0 0.0
    %516 = vmatpush2.msra.mxu0 0.0
    %517 = vmatprep.subr.mxu0 0.0
    %518 = vmatpush2.msra.mxu0 0.0
    %519 = vmatprep.subr.mxu0 0.0
    %520 = vmatpush2.msra.mxu0 0.0
    %521 = vmatprep.subr.mxu0 0.0
    %522 = vmatpush2.msra.mxu0 0.0
    %523 = vmatprep.subr.mxu0 0.0
    %524 = vmatpush2.msra.mxu0 0.0
    %525 = vmatprep.subr.mxu0 0.0
    %526 = vmatpush2.msra.mxu0 0.0
    %527 = vmatprep.subr.mxu0 0.0
    %528 = vmatpush2.msra.mxu0 0.0
    %529 = vmatprep.subr.mxu0 0.0
    %530 = vmatpush2.msra.mxu0 0.0
    %531 = vmatprep.mubr.f32.mxu0 0.0
    %532 = vmatmul.mubr.f32.gmra.mxu0 %v462
    %v533 = vpop.f32.mrf.mxu0
    %v534 = vadd.f32 0.0, %v533
    %v535 = vpop.f32.mrf.mxu0
    %v536 = vadd.f32 0.0, %v535
    %537 = vmatprep.mubr.f32.mxu0 0.0
    %538 = vmatmul.mubr.f32.gmra.mxu0 %v465
    %v539 = vpop.f32.mrf.mxu0
    %v540 = vadd.f32 0.0, %v539
    %v541 = vpop.f32.mrf.mxu0
    %v542 = vadd.f32 0.0, %v541
    %543 = vdwg.mxu0
    %v544 = vadd.f32 %v454, %v534
    %v545 = vadd.f32 %v455, %v536
    %v546 = vadd.f32 %v456, %v540
    %v547 = vadd.f32 %v457, %v542
    %548 = vrot.lane.b32.xlu0 %v18, 127
    %v549 = vpop.permute.xlu0 %548
    %550 = vrot.lane.b32.xlu0 %v19, 127
    %v551 = vpop.permute.xlu0 %550
    %vm552 = vcmp.lt.s32.totalorder %v29, 127
    %v553 = vsel %vm552, %v549, %v551
    %v554 = vsel %vm552, %v551, %v549
    %v555 = vlaneseq
    %v556 = vshrl.u32 %v555, 7
    %v557 = vsub.s32 5, %v556
    %v558 = vrot.slane %v35, %v557
    %v559 = vlaneseq
    %v560 = vshrl.u32 %v559, 7
    %v561 = vsub.s32 5, %v560
    %v562 = vrot.slane %v36, %v561
    %vm563 = vcmp.eq.s32.totalorder %v558, 1
    %vm564 = vcmp.eq.s32.totalorder %v562, 1
    %v565 = vsel %vm563, %v553, 0.0
    %v566 = vsel %vm564, %v554, 0.0
    %s567 = scalar_lea.vmem %s1, 80
    %v568 = vld [vmem:[%s567] sm:$0xff]
    %v569 = vld [vmem:[%s567 + $0x8] sm:$0xff]
    %v571 = vsel %vm73, %v568, 0
    %v574 = vsel %vm73, %v569, 0
    %576 = vmatprep.subr.mxu0 0.0
    %577 = vmatpush1.msra.mxu0 0.0
    %578 = vmatprep.subr.mxu0 0.0
    %579 = vmatpush1.msra.mxu0 0.0
    %580 = vmatprep.subr.mxu0 0.0
    %581 = vmatpush1.msra.mxu0 0.0
    %582 = vmatprep.subr.mxu0 0.0
    %583 = vmatpush1.msra.mxu0 0.0
    %584 = vmatprep.subr.mxu0 0.0
    %585 = vmatpush1.msra.mxu0 0.0
    %586 = vmatprep.subr.mxu0 0.0
    %587 = vmatpush1.msra.mxu0 0.0
    %588 = vmatprep.subr.mxu0 0.0
    %589 = vmatpush1.msra.mxu0 0.0
    %590 = vmatprep.subr.mxu0 0.0
    %591 = vmatpush1.msra.mxu0 0.0
    %592 = vmatprep.subr.mxu0 0.0
    %593 = vmatpush1.msra.mxu0 0.0
    %594 = vmatprep.subr.mxu0 0.0
    %595 = vmatpush1.msra.mxu0 0.0
    %596 = vmatprep.subr.mxu0 0.0
    %597 = vmatpush1.msra.mxu0 0.0
    %598 = vmatprep.subr.mxu0 0.0
    %599 = vmatpush1.msra.mxu0 0.0
    %600 = vmatprep.subr.mxu0 0.0
    %601 = vmatpush1.msra.mxu0 0.0
    %602 = vmatprep.subr.mxu0 0.0
    %603 = vmatpush1.msra.mxu0 0.0
    %604 = vmatprep.subr.mxu0 0.0
    %605 = vmatpush1.msra.mxu0 0.0
    %606 = vmatprep.subr.mxu0 %v566
    %607 = vmatpush1.msra.mxu0 %v565
    %608 = vmatprep.subr.mxu0 0.0
    %609 = vmatpush2.msra.mxu0 0.0
    %610 = vmatprep.subr.mxu0 0.0
    %611 = vmatpush2.msra.mxu0 0.0
    %612 = vmatprep.subr.mxu0 0.0
    %613 = vmatpush2.msra.mxu0 0.0
    %614 = vmatprep.subr.mxu0 0.0
    %615 = vmatpush2.msra.mxu0 0.0
    %616 = vmatprep.subr.mxu0 0.0
    %617 = vmatpush2.msra.mxu0 0.0
    %618 = vmatprep.subr.mxu0 0.0
    %619 = vmatpush2.msra.mxu0 0.0
    %620 = vmatprep.subr.mxu0 0.0
    %621 = vmatpush2.msra.mxu0 0.0
    %622 = vmatprep.subr.mxu0 0.0
    %623 = vmatpush2.msra.mxu0 0.0
    %624 = vmatprep.subr.mxu0 0.0
    %625 = vmatpush2.msra.mxu0 0.0
    %626 = vmatprep.subr.mxu0 0.0
    %627 = vmatpush2.msra.mxu0 0.0
    %628 = vmatprep.subr.mxu0 0.0
    %629 = vmatpush2.msra.mxu0 0.0
    %630 = vmatprep.subr.mxu0 0.0
    %631 = vmatpush2.msra.mxu0 0.0
    %632 = vmatprep.subr.mxu0 0.0
    %633 = vmatpush2.msra.mxu0 0.0
    %634 = vmatprep.subr.mxu0 0.0
    %635 = vmatpush2.msra.mxu0 0.0
    %636 = vmatprep.subr.mxu0 0.0
    %637 = vmatpush2.msra.mxu0 0.0
    %638 = vmatprep.subr.mxu0 0.0
    %639 = vmatpush2.msra.mxu0 0.0
    %640 = vmatprep.mubr.f32.mxu0 0.0
    %641 = vmatmul.mubr.f32.gmra.mxu0 %v571
    %v642 = vpop.f32.mrf.mxu0
    %v643 = vadd.f32 0.0, %v642
    %v644 = vpop.f32.mrf.mxu0
    %v645 = vadd.f32 0.0, %v644
    %646 = vmatprep.mubr.f32.mxu0 0.0
    %647 = vmatmul.mubr.f32.gmra.mxu0 %v574
    %v648 = vpop.f32.mrf.mxu0
    %v649 = vadd.f32 0.0, %v648
    %v650 = vpop.f32.mrf.mxu0
    %v651 = vadd.f32 0.0, %v650
    %652 = vdwg.mxu0
    %v653 = vadd.f32 %v544, %v643
    %v654 = vadd.f32 %v545, %v645
    %v655 = vadd.f32 %v546, %v649
    %v656 = vadd.f32 %v547, %v651
    %657 = vrot.lane.b32.xlu0 %v18, 113
    %v658 = vpop.permute.xlu0 %657
    %659 = vrot.lane.b32.xlu0 %v19, 113
    %v660 = vpop.permute.xlu0 %659
    %vm661 = vcmp.lt.s32.totalorder %v29, 113
    %v662 = vsel %vm661, %v658, %v660
    %v663 = vsel %vm661, %v660, %v658
    %v664 = vlaneseq
    %v665 = vshrl.u32 %v664, 7
    %v666 = vsub.s32 6, %v665
    %v667 = vrot.slane %v35, %v666
    %v668 = vlaneseq
    %v669 = vshrl.u32 %v668, 7
    %v670 = vsub.s32 6, %v669
    %v671 = vrot.slane %v36, %v670
    %vm672 = vcmp.eq.s32.totalorder %v667, 1
    %vm673 = vcmp.eq.s32.totalorder %v671, 1
    %v674 = vsel %vm672, %v662, 0.0
    %v675 = vsel %vm673, %v663, 0.0
    %s676 = scalar_lea.vmem %s1, 96
    %v677 = vld [vmem:[%s676] sm:$0xff]
    %v678 = vld [vmem:[%s676 + $0x8] sm:$0xff]
    %v680 = vsel %vm73, %v677, 0
    %v683 = vsel %vm73, %v678, 0
    %685 = vmatprep.subr.mxu0 0.0
    %686 = vmatpush1.msra.mxu0 0.0
    %687 = vmatprep.subr.mxu0 0.0
    %688 = vmatpush1.msra.mxu0 0.0
    %689 = vmatprep.subr.mxu0 0.0
    %690 = vmatpush1.msra.mxu0 0.0
    %691 = vmatprep.subr.mxu0 0.0
    %692 = vmatpush1.msra.mxu0 0.0
    %693 = vmatprep.subr.mxu0 0.0
    %694 = vmatpush1.msra.mxu0 0.0
    %695 = vmatprep.subr.mxu0 0.0
    %696 = vmatpush1.msra.mxu0 0.0
    %697 = vmatprep.subr.mxu0 0.0
    %698 = vmatpush1.msra.mxu0 0.0
    %699 = vmatprep.subr.mxu0 0.0
    %700 = vmatpush1.msra.mxu0 0.0
    %701 = vmatprep.subr.mxu0 0.0
    %702 = vmatpush1.msra.mxu0 0.0
    %703 = vmatprep.subr.mxu0 0.0
    %704 = vmatpush1.msra.mxu0 0.0
    %705 = vmatprep.subr.mxu0 0.0
    %706 = vmatpush1.msra.mxu0 0.0
    %707 = vmatprep.subr.mxu0 0.0
    %708 = vmatpush1.msra.mxu0 0.0
    %709 = vmatprep.subr.mxu0 0.0
    %710 = vmatpush1.msra.mxu0 0.0
    %711 = vmatprep.subr.mxu0 0.0
    %712 = vmatpush1.msra.mxu0 0.0
    %713 = vmatprep.subr.mxu0 0.0
    %714 = vmatpush1.msra.mxu0 0.0
    %715 = vmatprep.subr.mxu0 %v675
    %716 = vmatpush1.msra.mxu0 %v674
    %717 = vmatprep.subr.mxu0 0.0
    %718 = vmatpush2.msra.mxu0 0.0
    %719 = vmatprep.subr.mxu0 0.0
    %720 = vmatpush2.msra.mxu0 0.0
    %721 = vmatprep.subr.mxu0 0.0
    %722 = vmatpush2.msra.mxu0 0.0
    %723 = vmatprep.subr.mxu0 0.0
    %724 = vmatpush2.msra.mxu0 0.0
    %725 = vmatprep.subr.mxu0 0.0
    %726 = vmatpush2.msra.mxu0 0.0
    %727 = vmatprep.subr.mxu0 0.0
    %728 = vmatpush2.msra.mxu0 0.0
    %729 = vmatprep.subr.mxu0 0.0
    %730 = vmatpush2.msra.mxu0 0.0
    %731 = vmatprep.subr.mxu0 0.0
    %732 = vmatpush2.msra.mxu0 0.0
    %733 = vmatprep.subr.mxu0 0.0
    %734 = vmatpush2.msra.mxu0 0.0
    %735 = vmatprep.subr.mxu0 0.0
    %736 = vmatpush2.msra.mxu0 0.0
    %737 = vmatprep.subr.mxu0 0.0
    %738 = vmatpush2.msra.mxu0 0.0
    %739 = vmatprep.subr.mxu0 0.0
    %740 = vmatpush2.msra.mxu0 0.0
    %741 = vmatprep.subr.mxu0 0.0
    %742 = vmatpush2.msra.mxu0 0.0
    %743 = vmatprep.subr.mxu0 0.0
    %744 = vmatpush2.msra.mxu0 0.0
    %745 = vmatprep.subr.mxu0 0.0
    %746 = vmatpush2.msra.mxu0 0.0
    %747 = vmatprep.subr.mxu0 0.0
    %748 = vmatpush2.msra.mxu0 0.0
    %749 = vmatprep.mubr.f32.mxu0 0.0
    %750 = vmatmul.mubr.f32.gmra.mxu0 %v680
    %v751 = vpop.f32.mrf.mxu0
    %v752 = vadd.f32 0.0, %v751
    %v753 = vpop.f32.mrf.mxu0
    %v754 = vadd.f32 0.0, %v753
    %755 = vmatprep.mubr.f32.mxu0 0.0
    %756 = vmatmul.mubr.f32.gmra.mxu0 %v683
    %v757 = vpop.f32.mrf.mxu0
    %v758 = vadd.f32 0.0, %v757
    %v759 = vpop.f32.mrf.mxu0
    %v760 = vadd.f32 0.0, %v759
    %761 = vdwg.mxu0
    %v762 = vadd.f32 %v653, %v752
    %v763 = vadd.f32 %v654, %v754
    %v764 = vadd.f32 %v655, %v758
    %v765 = vadd.f32 %v656, %v760
    %766 = vrot.lane.b32.xlu0 %v18, 112
    %v767 = vpop.permute.xlu0 %766
    %768 = vrot.lane.b32.xlu0 %v19, 112
    %v769 = vpop.permute.xlu0 %768
    %vm770 = vcmp.lt.s32.totalorder %v29, 112
    %v771 = vsel %vm770, %v767, %v769
    %v772 = vsel %vm770, %v769, %v767
    %v773 = vlaneseq
    %v774 = vshrl.u32 %v773, 7
    %v775 = vsub.s32 7, %v774
    %v776 = vrot.slane %v35, %v775
    %v777 = vlaneseq
    %v778 = vshrl.u32 %v777, 7
    %v779 = vsub.s32 7, %v778
    %v780 = vrot.slane %v36, %v779
    %vm781 = vcmp.eq.s32.totalorder %v776, 1
    %vm782 = vcmp.eq.s32.totalorder %v780, 1
    %v783 = vsel %vm781, %v771, 0.0
    %v784 = vsel %vm782, %v772, 0.0
    %s785 = scalar_lea.vmem %s1, 112
    %v786 = vld [vmem:[%s785] sm:$0xff]
    %v787 = vld [vmem:[%s785 + $0x8] sm:$0xff]
    %v789 = vsel %vm73, %v786, 0
    %v792 = vsel %vm73, %v787, 0
    %794 = vmatprep.subr.mxu0 0.0
    %795 = vmatpush1.msra.mxu0 0.0
    %796 = vmatprep.subr.mxu0 0.0
    %797 = vmatpush1.msra.mxu0 0.0
    %798 = vmatprep.subr.mxu0 0.0
    %799 = vmatpush1.msra.mxu0 0.0
    %800 = vmatprep.subr.mxu0 0.0
    %801 = vmatpush1.msra.mxu0 0.0
    %802 = vmatprep.subr.mxu0 0.0
    %803 = vmatpush1.msra.mxu0 0.0
    %804 = vmatprep.subr.mxu0 0.0
    %805 = vmatpush1.msra.mxu0 0.0
    %806 = vmatprep.subr.mxu0 0.0
    %807 = vmatpush1.msra.mxu0 0.0
    %808 = vmatprep.subr.mxu0 0.0
    %809 = vmatpush1.msra.mxu0 0.0
    %810 = vmatprep.subr.mxu0 0.0
    %811 = vmatpush1.msra.mxu0 0.0
    %812 = vmatprep.subr.mxu0 0.0
    %813 = vmatpush1.msra.mxu0 0.0
    %814 = vmatprep.subr.mxu0 0.0
    %815 = vmatpush1.msra.mxu0 0.0
    %816 = vmatprep.subr.mxu0 0.0
    %817 = vmatpush1.msra.mxu0 0.0
    %818 = vmatprep.subr.mxu0 0.0
    %819 = vmatpush1.msra.mxu0 0.0
    %820 = vmatprep.subr.mxu0 0.0
    %821 = vmatpush1.msra.mxu0 0.0
    %822 = vmatprep.subr.mxu0 0.0
    %823 = vmatpush1.msra.mxu0 0.0
    %824 = vmatprep.subr.mxu0 %v784
    %825 = vmatpush1.msra.mxu0 %v783
    %826 = vmatprep.subr.mxu0 0.0
    %827 = vmatpush2.msra.mxu0 0.0
    %828 = vmatprep.subr.mxu0 0.0
    %829 = vmatpush2.msra.mxu0 0.0
    %830 = vmatprep.subr.mxu0 0.0
    %831 = vmatpush2.msra.mxu0 0.0
    %832 = vmatprep.subr.mxu0 0.0
    %833 = vmatpush2.msra.mxu0 0.0
    %834 = vmatprep.subr.mxu0 0.0
    %835 = vmatpush2.msra.mxu0 0.0
    %836 = vmatprep.subr.mxu0 0.0
    %837 = vmatpush2.msra.mxu0 0.0
    %838 = vmatprep.subr.mxu0 0.0
    %839 = vmatpush2.msra.mxu0 0.0
    %840 = vmatprep.subr.mxu0 0.0
    %841 = vmatpush2.msra.mxu0 0.0
    %842 = vmatprep.subr.mxu0 0.0
    %843 = vmatpush2.msra.mxu0 0.0
    %844 = vmatprep.subr.mxu0 0.0
    %845 = vmatpush2.msra.mxu0 0.0
    %846 = vmatprep.subr.mxu0 0.0
    %847 = vmatpush2.msra.mxu0 0.0
    %848 = vmatprep.subr.mxu0 0.0
    %849 = vmatpush2.msra.mxu0 0.0
    %850 = vmatprep.subr.mxu0 0.0
    %851 = vmatpush2.msra.mxu0 0.0
    %852 = vmatprep.subr.mxu0 0.0
    %853 = vmatpush2.msra.mxu0 0.0
    %854 = vmatprep.subr.mxu0 0.0
    %855 = vmatpush2.msra.mxu0 0.0
    %856 = vmatprep.subr.mxu0 0.0
    %857 = vmatpush2.msra.mxu0 0.0
    %858 = vmatprep.mubr.f32.mxu0 0.0
    %859 = vmatmul.mubr.f32.gmra.mxu0 %v789
    %v860 = vpop.f32.mrf.mxu0
    %v861 = vadd.f32 0.0, %v860
    %v862 = vpop.f32.mrf.mxu0
    %v863 = vadd.f32 0.0, %v862
    %864 = vmatprep.mubr.f32.mxu0 0.0
    %865 = vmatmul.mubr.f32.gmra.mxu0 %v792
    %v866 = vpop.f32.mrf.mxu0
    %v867 = vadd.f32 0.0, %v866
    %v868 = vpop.f32.mrf.mxu0
    %v869 = vadd.f32 0.0, %v868
    %870 = vdwg.mxu0
    %v871 = vadd.f32 %v762, %v861
    %v872 = vadd.f32 %v763, %v863
    %v873 = vadd.f32 %v764, %v867
    %v874 = vadd.f32 %v765, %v869
    %875 = vrot.lane.b32.xlu0 %v18, 111
    %v876 = vpop.permute.xlu0 %875
    %877 = vrot.lane.b32.xlu0 %v19, 111
    %v878 = vpop.permute.xlu0 %877
    %vm879 = vcmp.lt.s32.totalorder %v29, 111
    %v880 = vsel %vm879, %v876, %v878
    %v881 = vsel %vm879, %v878, %v876
    %vm882 = vcmp.ne.f32.partialorder %v22, 0.0
    %vm883 = vcmp.ne.f32.partialorder %v23, 0.0
    %v884 = vsel %vm882, 1, 0
    %v885 = vsel %vm883, 1, 0
    %v886 = vlaneseq
    %v887 = vshrl.u32 %v886, 7
    %v888 = vsub.s32 0, %v887
    %v889 = vrot.slane %v884, %v888
    %v890 = vlaneseq
    %v891 = vshrl.u32 %v890, 7
    %v892 = vsub.s32 0, %v891
    %v893 = vrot.slane %v885, %v892
    %vm894 = vcmp.eq.s32.totalorder %v889, 1
    %vm895 = vcmp.eq.s32.totalorder %v893, 1
    %v896 = vsel %vm894, %v880, 0.0
    %v897 = vsel %vm895, %v881, 0.0
    %s898 = scalar_lea.vmem %s1, 128
    %v899 = vld [vmem:[%s898] sm:$0xff]
    %v900 = vld [vmem:[%s898 + $0x8] sm:$0xff]
    %v902 = vsel %vm73, %v899, 0
    %v905 = vsel %vm73, %v900, 0
    %907 = vmatprep.subr.mxu0 0.0
    %908 = vmatpush1.msra.mxu0 0.0
    %909 = vmatprep.subr.mxu0 0.0
    %910 = vmatpush1.msra.mxu0 0.0
    %911 = vmatprep.subr.mxu0 0.0
    %912 = vmatpush1.msra.mxu0 0.0
    %913 = vmatprep.subr.mxu0 0.0
    %914 = vmatpush1.msra.mxu0 0.0
    %915 = vmatprep.subr.mxu0 0.0
    %916 = vmatpush1.msra.mxu0 0.0
    %917 = vmatprep.subr.mxu0 0.0
    %918 = vmatpush1.msra.mxu0 0.0
    %919 = vmatprep.subr.mxu0 0.0
    %920 = vmatpush1.msra.mxu0 0.0
    %921 = vmatprep.subr.mxu0 0.0
    %922 = vmatpush1.msra.mxu0 0.0
    %923 = vmatprep.subr.mxu0 0.0
    %924 = vmatpush1.msra.mxu0 0.0
    %925 = vmatprep.subr.mxu0 0.0
    %926 = vmatpush1.msra.mxu0 0.0
    %927 = vmatprep.subr.mxu0 0.0
    %928 = vmatpush1.msra.mxu0 0.0
    %929 = vmatprep.subr.mxu0 0.0
    %930 = vmatpush1.msra.mxu0 0.0
    %931 = vmatprep.subr.mxu0 0.0
    %932 = vmatpush1.msra.mxu0 0.0
    %933 = vmatprep.subr.mxu0 0.0
    %934 = vmatpush1.msra.mxu0 0.0
    %935 = vmatprep.subr.mxu0 0.0
    %936 = vmatpush1.msra.mxu0 0.0
    %937 = vmatprep.subr.mxu0 %v897
    %938 = vmatpush1.msra.mxu0 %v896
    %939 = vmatprep.subr.mxu0 0.0
    %940 = vmatpush2.msra.mxu0 0.0
    %941 = vmatprep.subr.mxu0 0.0
    %942 = vmatpush2.msra.mxu0 0.0
    %943 = vmatprep.subr.mxu0 0.0
    %944 = vmatpush2.msra.mxu0 0.0
    %945 = vmatprep.subr.mxu0 0.0
    %946 = vmatpush2.msra.mxu0 0.0
    %947 = vmatprep.subr.mxu0 0.0
    %948 = vmatpush2.msra.mxu0 0.0
    %949 = vmatprep.subr.mxu0 0.0
    %950 = vmatpush2.msra.mxu0 0.0
    %951 = vmatprep.subr.mxu0 0.0
    %952 = vmatpush2.msra.mxu0 0.0
    %953 = vmatprep.subr.mxu0 0.0
    %954 = vmatpush2.msra.mxu0 0.0
    %955 = vmatprep.subr.mxu0 0.0
    %956 = vmatpush2.msra.mxu0 0.0
    %957 = vmatprep.subr.mxu0 0.0
    %958 = vmatpush2.msra.mxu0 0.0
    %959 = vmatprep.subr.mxu0 0.0
    %960 = vmatpush2.msra.mxu0 0.0
    %961 = vmatprep.subr.mxu0 0.0
    %962 = vmatpush2.msra.mxu0 0.0
    %963 = vmatprep.subr.mxu0 0.0
    %964 = vmatpush2.msra.mxu0 0.0
    %965 = vmatprep.subr.mxu0 0.0
    %966 = vmatpush2.msra.mxu0 0.0
    %967 = vmatprep.subr.mxu0 0.0
    %968 = vmatpush2.msra.mxu0 0.0
    %969 = vmatprep.subr.mxu0 0.0
    %970 = vmatpush2.msra.mxu0 0.0
    %971 = vmatprep.mubr.f32.mxu0 0.0
    %972 = vmatmul.mubr.f32.gmra.mxu0 %v902
    %v973 = vpop.f32.mrf.mxu0
    %v974 = vadd.f32 0.0, %v973
    %v975 = vpop.f32.mrf.mxu0
    %v976 = vadd.f32 0.0, %v975
    %977 = vmatprep.mubr.f32.mxu0 0.0
    %978 = vmatmul.mubr.f32.gmra.mxu0 %v905
    %v979 = vpop.f32.mrf.mxu0
    %v980 = vadd.f32 0.0, %v979
    %v981 = vpop.f32.mrf.mxu0
    %v982 = vadd.f32 0.0, %v981
    %983 = vdwg.mxu0
    %v984 = vadd.f32 %v871, %v974
    %v985 = vadd.f32 %v872, %v976
    %v986 = vadd.f32 %v873, %v980
    %v987 = vadd.f32 %v874, %v982
    %v988 = vld [vmem:[%s2] sm:$0xff]
    %v989 = vld [vmem:[%s2 + $0x8] sm:$0xff]
    %991 = vset.pattern.permute.xlu0 0
    %992 = vperm.xlu0 %991, %v988
    %v993 = vpop.permute.xlu0 %992
    %996 = vset.pattern.permute.xlu0 0
    %997 = vperm.xlu0 %996, %v989
    %v998 = vpop.permute.xlu0 %997
    %v1000 = vadd.f32 %v984, %v993
    %v1001 = vadd.f32 %v985, %v993
    %v1002 = vadd.f32 %v986, %v998
    %v1003 = vadd.f32 %v987, %v998
    %v1004 = vmax.f32 %v1000, 0.0
    %v1005 = vmax.f32 %v1001, 0.0
    %v1006 = vmax.f32 %v1002, 0.0
    %v1007 = vmax.f32 %v1003, 0.0
    %1008 = vst [vmem:[#allocation2] sm:$0xf] %v18
    %1009 = vst [vmem:[#allocation2 + $0x8] sm:$0xf] %v19
    %v1012 = vrot.slane %v1004, 4
    %v1013 = vrot.slane %v1005, 4
    %1016 = vst [vmem:[#allocation2] sm:$0xf0] %v1012
    %1017 = vst [vmem:[#allocation2 + $0x8] sm:$0xf0] %v1013
    %1018 = vst [vmem:[#allocation2 + $0x10] sm:$0xf] %v1012
    %1019 = vst [vmem:[#allocation2 + $0x18] sm:$0xf] %v1013
    %1020 = vst [vmem:[#allocation2 + $0x10] sm:$0xf0] %v18
    %1021 = vst [vmem:[#allocation2 + $0x18] sm:$0xf0] %v19
    %1022 = vst [vmem:[#allocation2 + $0x20] sm:$0xff] %v1006
    %1023 = vst [vmem:[#allocation2 + $0x28] sm:$0xff] %v1007
    // Predicated region
    $region18: #{tpu_custom_call.1} parent=1 // pred_check
      _
    $region19: #{tpu_custom_call.1} parent=1 // pred_check_branch
      %1025 = sbr.rel (0) target = $region21
    $region20: #{tpu_custom_call.1} parent=1 // pred_region
      %s1027 = ssub.s32 768, 768
      %1028 = vsyncadd [#allocation3], %s1027
      %s1029 = sshll.u32 [#allocation2], 4
      %s1030 = int_to_ptr.vmem [resolvable:$true] %s1029
      %1035 = dma.vmem_to_hbm [thread:$0]  %s1030, 768, %s4, [#allocation3], 256, 256, 16
    $region21: #{tpu_custom_call.1} parent=1 // pred_fallthru
      _
    // Predicated region
    $region22: #{tpu_custom_call.1} parent=1 // pred_check
      _
    $region23: #{tpu_custom_call.1} parent=1 // pred_check_branch
      %1037 = sbr.rel (0) target = $region25
    $region24: #{tpu_custom_call.1} parent=1 // pred_region
      %1038 = dma.done [#allocation3], 768
    $region25: #{tpu_custom_call.1} parent=1 // pred_fallthru
      _
    %1039 = vsyncpa [#allocation3], 1

</llo_original>
